<compile_context>
chip_gen: v5e
topology: v5e:2x2
jax: 0.10.0
libtpu: 0.0.40
codegen_flags: <defaults>
</compile_context>

<pallas_src>
import jax
import jax.numpy as jnp
from jax.experimental import pallas as pl
from jax.experimental.pallas import tpu as pltpu

_LANES = 512           # lane-dense slab width (multiple of 128)
_MAX_BLOCK_ROWS = 512  # 512x512 f32 block = 1 MiB; x2 buffers = 2 MiB (fits v5e/v6e/v7x)


def _round_up(n, m):
    return ((n + m - 1) // m) * m


def _fused_lrelu_sum_kernel(x_ref, o_ref, acc_ref):
    i = pl.program_id(0)

    @pl.when(i == 0)
    def _init():
        acc_ref[...] = jnp.zeros_like(acc_ref)

    v = x_ref[...]
    if v.dtype != jnp.float32:       # trace-time check; bf16 read -> f32 math
        v = v.astype(jnp.float32)

    # leaky_relu(0.2) + leaky_relu(0.05), with the folded cat([x,x],1) x2:
    #   pos -> 4*v , neg -> 0.5*v
    fused = jnp.where(v >= 0, 4.0 * v, 0.5 * v)

    # Per-tile: sublane-only reduce into a (1, LANES) running vector partial.
    acc_ref[...] += jnp.sum(fused, axis=0, keepdims=True)

    @pl.when(i == pl.num_programs(0) - 1)
    def _finalize():
        # Cross-lane reduce + scalar store only once, at the last grid step.
        o_ref[0] = jnp.sum(acc_ref[...])


def model_forward(x):
    total = x.size
    n_rows = max(1, -(-total // _LANES))
    block_rows = min(_MAX_BLOCK_ROWS, _round_up(n_rows, 8))
    n_rows_padded = _round_up(n_rows, block_rows)

    # Lane-dense slab; zero padding is sum-neutral (fused(0) == 0).
    xf = x.reshape(-1)
    pad = n_rows_padded * _LANES - total
    if pad:
        xf = jnp.pad(xf, (0, pad))
    x2d = xf.reshape(n_rows_padded, _LANES)

    grid = (n_rows_padded // block_rows,)

    out = pl.pallas_call(
        _fused_lrelu_sum_kernel,
        out_shape=jax.ShapeDtypeStruct((1,), jnp.float32),
        grid_spec=pltpu.PrefetchScalarGridSpec(
            num_scalar_prefetch=0,
            grid=grid,
            in_specs=[pl.BlockSpec((block_rows, _LANES), lambda i: (i, 0))],
            out_specs=pl.BlockSpec(memory_space=pltpu.MemorySpace.SMEM),
            scratch_shapes=[pltpu.VMEM((1, _LANES), jnp.float32)],
        ),
        compiler_params=pltpu.CompilerParams(
            dimension_semantics=("arbitrary",)),   # reduction axis
    )(x2d)
    return out[0]


if __name__ == "__main__":
    key = jax.random.PRNGKey(0)
    x = jax.random.normal(key, (2, 3, 4), dtype=jnp.float32)

    result = jax.block_until_ready(model_forward(x))

    # Reference in plain JAX (matches the original PyTorch module exactly).
    xx = jnp.concatenate([x, x], axis=1).reshape(x.shape[0], -1)
    ref = jnp.sum(jnp.where(xx >= 0, xx, 0.2 * xx)
                  + jnp.where(xx >= 0, xx, 0.05 * xx))
    assert jnp.allclose(result, ref, rtol=1e-5, atol=1e-5), (result, ref)

    print("KERNEL_OK")
</pallas_src>

<mosaic_0001>
module attributes {stable_mosaic.version = 11 : i64} {
  func.func @_fused_lrelu_sum_kernel(%arg0: i32, %arg1: memref<8x512xf32, #tpu.memory_space<vmem>>, %arg2: memref<1xf32, #tpu.memory_space<smem>>, %arg3: memref<1x512xf32, #tpu.memory_space<vmem>>) attributes {dimension_semantics = [#tpu.dimension_semantics<arbitrary>], iteration_bounds = array<i64: 1>, scalar_prefetch = 0 : i64, scratch_operands = 1 : i64, tpu.core_type = #tpu.core_type<tc>, window_params = [{transform_indices = @transform_0, window_bounds = array<i64: 8, 512>}, {transform_indices = @transform_1, window_bounds = array<i64: 1>}]} {
    %c0_i32 = arith.constant 0 : i32
    %0 = arith.cmpi eq, %arg0, %c0_i32 : i32
    %1 = arith.extui %0 : i1 to i32
    %c0_i32_0 = arith.constant 0 : i32
    %2 = arith.cmpi ne, %1, %c0_i32_0 : i32
    scf.if %2 {
      %cst_11 = arith.constant 0.000000e+00 : f32
      %19 = vector.broadcast %cst_11 : f32 to vector<1x512xf32>
      %c0_12 = arith.constant 0 : index
      %c0_13 = arith.constant 0 : index
      %20 = vector.load %arg3[%c0_12, %c0_13] : memref<1x512xf32, #tpu.memory_space<vmem>>, vector<1x512xf32>
      tpu.vector_store %arg3[%c0_12, %c0_13], %19 {strides = array<i32>} : memref<1x512xf32, #tpu.memory_space<vmem>>, vector<1x512xf32>,
    } else {
    }
    %c0 = arith.constant 0 : index
    %c0_1 = arith.constant 0 : index
    %3 = vector.load %arg1[%c0, %c0_1] : memref<8x512xf32, #tpu.memory_space<vmem>>, vector<8x512xf32>
    %cst = arith.constant 0.000000e+00 : f32
    %4 = vector.broadcast %cst : f32 to vector<8x512xf32>
    %5 = arith.cmpf oge, %3, %4 : vector<8x512xf32>
    %cst_2 = arith.constant 4.000000e+00 : f32
    %6 = vector.broadcast %cst_2 : f32 to vector<8x512xf32>
    %7 = arith.mulf %6, %3 : vector<8x512xf32>
    %cst_3 = arith.constant 5.000000e-01 : f32
    %8 = vector.broadcast %cst_3 : f32 to vector<8x512xf32>
    %9 = arith.mulf %8, %3 : vector<8x512xf32>
    %10 = arith.select %5, %7, %9 : vector<8x512xi1>, vector<8x512xf32>
    %c0_4 = arith.constant 0 : index
    %c0_5 = arith.constant 0 : index
    %11 = vector.load %arg3[%c0_4, %c0_5] : memref<1x512xf32, #tpu.memory_space<vmem>>, vector<1x512xf32>
    %cst_6 = arith.constant dense<0.000000e+00> : vector<512xf32>
    %12 = vector.multi_reduction <add>, %10, %cst_6 [0] : vector<8x512xf32> to vector<512xf32>
    %13 = vector.shape_cast %12 : vector<512xf32> to vector<1x512xf32>
    %14 = arith.addf %11, %13 : vector<1x512xf32>
    %c0_7 = arith.constant 0 : index
    %c0_8 = arith.constant 0 : index
    %15 = vector.load %arg3[%c0_7, %c0_8] : memref<1x512xf32, #tpu.memory_space<vmem>>, vector<1x512xf32>
    tpu.vector_store %arg3[%c0_7, %c0_8], %14 {strides = array<i32>} : memref<1x512xf32, #tpu.memory_space<vmem>>, vector<1x512xf32>,
    %c0_i32_9 = arith.constant 0 : i32
    %16 = arith.cmpi eq, %arg0, %c0_i32_9 : i32
    %17 = arith.extui %16 : i1 to i32
    %c0_i32_10 = arith.constant 0 : i32
    %18 = arith.cmpi ne, %17, %c0_i32_10 : i32
    scf.if %18 {
      %c0_11 = arith.constant 0 : index
      %c0_12 = arith.constant 0 : index
      %19 = vector.load %arg3[%c0_11, %c0_12] : memref<1x512xf32, #tpu.memory_space<vmem>>, vector<1x512xf32>
      %20 = vector.shape_cast %19 : vector<1x512xf32> to vector<1x1x512xf32>
      %cst_13 = arith.constant dense<0.000000e+00> : vector<1xf32>
      %21 = vector.multi_reduction <add>, %20, %cst_13 [1, 2] : vector<1x1x512xf32> to vector<1xf32>
      %22 = vector.shape_cast %21 : vector<1xf32> to vector<1x1x1xf32>
      %23 = vector.extract %22[0, 0, 0] : f32 from vector<1x1x1xf32>
      %c0_14 = arith.constant 0 : index
      %24 = memref.load %arg2[%c0_14] : memref<1xf32, #tpu.memory_space<smem>>
      memref.store %23, %arg2[%c0_14] : memref<1xf32, #tpu.memory_space<smem>>
    } else {
    }
    return
  }
  func.func @transform_0(%arg0: i32) -> (i32, i32) {
    %c0_i32 = arith.constant 0 : i32
    %c0_i32_0 = arith.constant 0 : i32
    return %arg0, %c0_i32 : i32, i32
  }
  func.func @transform_1(%arg0: i32) -> i32 {
    %c0_i32 = arith.constant 0 : i32
    %c0_i32_0 = arith.constant 0 : i32
    return %c0_i32 : i32
  }
}

</mosaic_0001>

<llo_original>
// kernel: tpu_custom_call.1
$region0: #{tpu_custom_call.1}
  #allocation0 [shape = 'u32[]', space=smem, size = 0x4, offset = 0x4, fixed_abs, tag = 'smem constant byte address 0x4 - core index']
  #allocation1 [shape = 'u32[72,128]{1,0:T(1,128)}', space=vmem, size = 0x9000, scoped, tag = 'internal scratch']
  #allocation2 [shape = 'f32[1,512]{1,0:T(1,128)}', space=vmem, size = 0x800, scoped, tag = 'scratch operand']
  %s0 = inlined_call_operand.hbm [shape: f32[8,512], index: 0, kind: input, shape index: {}]
  %s1 = inlined_call_operand.hbm [shape: f32[1], index: 1, kind: output, shape index: {}]
  %s2 = sld [smem:[#allocation0]]
  $region26: #{tpu_custom_call.1} parent=0
    _
  %s4 = ssub.s32 1, %s2
  %s5 = scalar_select 0, %s4, %s2
  $region1: #{tpu_custom_call.1} parent=0
    #allocation3 [shape = 'u8[16384]{0}', space=vmem, size = 0x4000, scoped, tag = 'input window, operand 0, single buffered']
    #allocation4 [shape = 's32[1]{0}', space=sflag, size = 0x4, scoped, tag = 'scoped memory for tpu_custom_call.1']
    #allocation5 [shape = 's32[1]{0}', space=sflag, size = 0x4, scoped, tag = 'scoped memory for tpu_custom_call.1']
    #allocation6 [shape = 'u8[512]{0}', space=smem, size = 0x200, scoped, tag = 'output window, operand 0, single buffered']
    %6 = vsyncpa [#allocation4], 0
    %7 = vsyncpa [#allocation5], 0
    // Predicated region
    $region2: #{tpu_custom_call.1} parent=1 // pred_check
      _
    $region3: #{tpu_custom_call.1} parent=1 // pred_check_branch
      %9 = sbr.rel (0) target = $region5
    $region4: #{tpu_custom_call.1} parent=1 // pred_region
      %11 = vsyncadd [#allocation4], 0
      %s13 = sshll.u32 %s0, 4
      %s14 = int_to_ptr.hbm [resolvable:$true] %s13
      %s15 = sshll.u32 [#allocation3], 4
      %s16 = int_to_ptr.vmem [resolvable:$true] %s15
      %18 = dma.hbm_to_vmem [thread:$0]  %s14, 512, %s16, [#allocation4]
    $region5: #{tpu_custom_call.1} parent=1 // pred_fallthru
      _
    // Predicated region
    $region6: #{tpu_custom_call.1} parent=1 // pred_check
      _
    $region7: #{tpu_custom_call.1} parent=1 // pred_check_branch
      %20 = sbr.rel (0) target = $region9
    $region8: #{tpu_custom_call.1} parent=1 // pred_region
      %22 = dma.done [#allocation4], 512
    $region9: #{tpu_custom_call.1} parent=1 // pred_fallthru
      _
    %p23 = scmp.eq.s32.totalorder 0, 0
    // Predicated region
    $region10: #{tpu_custom_call.1} parent=1 // pred_check
      %p24 = pneg %p23
    $region11: #{tpu_custom_call.1} parent=1 // pred_check_branch
      %26 = sbr.rel (%p24) target = $region13
    $region12: #{tpu_custom_call.1} parent=1 // pred_region
      %v27 = vlaneseq
      %vm28 = vcmp.ge.s32.totalorder %v27, 0
      %vm29 = vcmp.lt.s32.totalorder %v27, 512
      %vm30 = vmand %vm28, %vm29
      %31 = vst.msk [vmem:[#allocation2] sm:$0xf] %vm30, 0.0
    $region13: #{tpu_custom_call.1} parent=1 // pred_fallthru
      _
    %v32 = vld [vmem:[#allocation3] sm:$0xff]
    %v33 = vld [vmem:[#allocation3 + $0x8] sm:$0xff]
    %v34 = vld [vmem:[#allocation3 + $0x10] sm:$0xff]
    %v35 = vld [vmem:[#allocation3 + $0x18] sm:$0xff]
    %vm36 = vcmp.ge.f32.partialorder %v32, 0.0
    %vm37 = vcmp.ge.f32.partialorder %v33, 0.0
    %vm38 = vcmp.ge.f32.partialorder %v34, 0.0
    %vm39 = vcmp.ge.f32.partialorder %v35, 0.0
    %v40 = vmul.f32 %v32, 4.0
    %v41 = vmul.f32 %v33, 4.0
    %v42 = vmul.f32 %v34, 4.0
    %v43 = vmul.f32 %v35, 4.0
    %v44 = vmul.f32 %v32, 0.5
    %v45 = vmul.f32 %v33, 0.5
    %v46 = vmul.f32 %v34, 0.5
    %v47 = vmul.f32 %v35, 0.5
    %v48 = vsel %vm36, %v40, %v44
    %v49 = vsel %vm37, %v41, %v45
    %v50 = vsel %vm38, %v42, %v46
    %v51 = vsel %vm39, %v43, %v47
    %v52 = vld [vmem:[#allocation2] sm:$0xf]
    %v53 = vrot.slane %v48, 4
    %v54 = vadd.f32 %v48, %v53
    %v55 = vrot.slane %v54, 2
    %v56 = vadd.f32 %v54, %v55
    %v57 = vrot.slane %v56, 1
    %v58 = vadd.f32 %v56, %v57
    %v59 = vrot.slane %v49, 4
    %v60 = vadd.f32 %v49, %v59
    %v61 = vrot.slane %v60, 2
    %v62 = vadd.f32 %v60, %v61
    %v63 = vrot.slane %v62, 1
    %v64 = vadd.f32 %v62, %v63
    %v65 = vrot.slane %v50, 4
    %v66 = vadd.f32 %v50, %v65
    %v67 = vrot.slane %v66, 2
    %v68 = vadd.f32 %v66, %v67
    %v69 = vrot.slane %v68, 1
    %v70 = vadd.f32 %v68, %v69
    %v71 = vrot.slane %v51, 4
    %v72 = vadd.f32 %v51, %v71
    %v73 = vrot.slane %v72, 2
    %v74 = vadd.f32 %v72, %v73
    %v75 = vrot.slane %v74, 1
    %v76 = vadd.f32 %v74, %v75
    %v81 = vrot.slane %v64, 7
    %v82 = vrot.slane %v70, 6
    %v83 = vrot.slane %v76, 5
    %vm84 = vcmask 1040384
    %v85 = vsel %vm84, %v58, %v81
    %vm86 = vcmask 1042434
    %v87 = vsel %vm86, %v82, %v83
    %vm88 = vcmask 1041408
    %v89 = vsel %vm88, %v85, %v87
    %v91 = vadd.f32 %v52, %v89
    %v92 = vlaneseq
    %vm93 = vcmp.ge.s32.totalorder %v92, 0
    %vm94 = vcmp.lt.s32.totalorder %v92, 512
    %vm95 = vmand %vm93, %vm94
    %96 = vst.msk [vmem:[#allocation2] sm:$0xf] %vm95, %v91
    // Predicated region
    $region14: #{tpu_custom_call.1} parent=1 // pred_check
      %p97 = pneg %p23
    $region15: #{tpu_custom_call.1} parent=1 // pred_check_branch
      %99 = sbr.rel (%p97) target = $region17
    $region16: #{tpu_custom_call.1} parent=1 // pred_region
      %v100 = vld [vmem:[#allocation2] sm:$0xf]
      %v102 = vperm.slane %v100, 0
      %v103 = vperm.slane %v100, 1
      %v104 = vperm.slane %v100, 2
      %v105 = vperm.slane %v100, 3
      %v110 = vsel %vm84, %v102, 0.0
      %v111 = vsel %vm84, %v103, 0.0
      %v112 = vadd.f32 %v110, %v111
      %v113 = vsel %vm84, %v104, 0.0
      %v114 = vadd.f32 %v112, %v113
      %v115 = vsel %vm84, %v105, 0.0
      %v116 = vadd.f32 %v114, %v115
      %117 = vadd.xlane.f32.xlu0 %v116
      %v118 = vpop.xlane.xlu0 %117
      %v119 = vrot.slane %v118, 4
      %v120 = vadd.f32 %v118, %v119
      %v121 = vrot.slane %v120, 2
      %v122 = vadd.f32 %v120, %v121
      %v123 = vrot.slane %v122, 1
      %v124 = vadd.f32 %v122, %v123
      %s125 = vtos %v124
      %s126 = scalar_lea.smem [#allocation6], 0
      %127 = sst [smem:[%s126]] %s125
    $region17: #{tpu_custom_call.1} parent=1 // pred_fallthru
      _
    // Predicated region
    $region18: #{tpu_custom_call.1} parent=1 // pred_check
      _
    $region19: #{tpu_custom_call.1} parent=1 // pred_check_branch
      %129 = sbr.rel (0) target = $region21
    $region20: #{tpu_custom_call.1} parent=1 // pred_region
      %131 = vsyncadd [#allocation5], 0
      %s133 = sshll.u32 %s1, 4
      %s134 = int_to_ptr.hbm [resolvable:$true] %s133
      %136 = dma.smem_to_hbm [#allocation6], 16, %s134, [#allocation5]
    $region21: #{tpu_custom_call.1} parent=1 // pred_fallthru
      _
    // Predicated region
    $region22: #{tpu_custom_call.1} parent=1 // pred_check
      _
    $region23: #{tpu_custom_call.1} parent=1 // pred_check_branch
      %138 = sbr.rel (0) target = $region25
    $region24: #{tpu_custom_call.1} parent=1 // pred_region
      %140 = dma.done [#allocation5], 16
    $region25: #{tpu_custom_call.1} parent=1 // pred_fallthru
      _
    %141 = sfence
    %142 = vsyncpa [#allocation4], 1
    %143 = vsyncpa [#allocation5], 1

</llo_original>
